<compile_context>
chip_gen: v7x
topology: tpu7x:2x2x1
jax: 0.10.0
libtpu: 0.0.40
codegen_flags: <defaults>
</compile_context>

<pallas_src>
import math

import jax
import jax.numpy as jnp
from jax.experimental import pallas as pl
from jax.experimental.pallas import tpu as pltpu


def _round_up(x, m):
    return (x + m - 1) // m * m


def _linear_init(key, fan_in, fan_out):
    """Deterministic nn.Linear-style init: U(-1/sqrt(fan_in), 1/sqrt(fan_in))."""
    kw, kb = jax.random.split(key)
    bound = 1.0 / math.sqrt(fan_in)
    w = jax.random.uniform(kw, (fan_in, fan_out), jnp.float32, -bound, bound)
    b = jax.random.uniform(kb, (1, fan_out), jnp.float32, -bound, bound)
    return w, b


def _fused_head_kernel(x_ref, w1_ref, b1_ref, w2_ref, b2_ref, out_ref, acc_ref):
    """Grid point = (branch j, K-tile k).

    acc += x_tile @ W1_tile           (streamed over k, f32 accumulator)
    last k:  out = relu(acc + b1) @ W2 + b2   (lane-padded 128-wide slab)
    """
    k = pl.program_id(1)

    @pl.when(k == 0)
    def _():
        acc_ref[...] = jnp.zeros_like(acc_ref)

    # bf16 x bf16 -> f32 accumulate on the MXU.
    acc_ref[...] += jnp.dot(x_ref[...], w1_ref[0],
                            preferred_element_type=jnp.float32)

    @pl.when(k == pl.num_programs(1) - 1)
    def _():
        h = jnp.maximum(acc_ref[...] + b1_ref[0], 0.0)          # ReLU (VPU)
        o = jnp.dot(h.astype(w2_ref.dtype), w2_ref[0],
                    preferred_element_type=jnp.float32)
        out_ref[0, :, :] = (o + b2_ref[0]).astype(out_ref.dtype)


def _fused_forward(x2d, w1s, b1s, w2s, b2s, *, tk):
    """Run both branches (stacked along axis 0 of the weights) in one call."""
    B, K = x2d.shape
    nb, K_pad, Hdim = w1s.shape
    OUT_PAD = w2s.shape[2]

    if K_pad != K:
        x2d = jnp.pad(x2d, ((0, 0), (0, K_pad - K)))
    xb = x2d.astype(jnp.bfloat16)

    nk = K_pad // tk
    itemsize = 2  # bf16 weights / activations

    cost = pl.CostEstimate(
        flops=2 * nb * B * K_pad * Hdim + 2 * nb * B * Hdim * OUT_PAD,
        transcendentals=0,
        bytes_accessed=(w1s.size * itemsize + w2s.size * itemsize
                        + nb * B * K_pad * itemsize          # x per branch
                        + b1s.size * 4 + b2s.size * 4
                        + nb * B * OUT_PAD * 4),
    )

    out = pl.pallas_call(
        _fused_head_kernel,
        out_shape=jax.ShapeDtypeStruct((nb, B, OUT_PAD), jnp.float32),
        grid_spec=pltpu.PrefetchScalarGridSpec(
            num_scalar_prefetch=0,
            grid=(nb, nk),
            in_specs=[
                pl.BlockSpec((B, tk), lambda j, k: (0, k)),          # x
                pl.BlockSpec((1, tk, Hdim), lambda j, k: (j, k, 0)),  # W1 (bf16)
                pl.BlockSpec((1, 1, Hdim), lambda j, k: (j, 0, 0)),   # b1 (f32)
                pl.BlockSpec((1, Hdim, OUT_PAD), lambda j, k: (j, 0, 0)),  # W2
                pl.BlockSpec((1, 1, OUT_PAD), lambda j, k: (j, 0, 0)),     # b2
            ],
            out_specs=pl.BlockSpec((1, B, OUT_PAD), lambda j, k: (j, 0, 0)),
            scratch_shapes=[pltpu.VMEM((B, Hdim), jnp.float32)],
        ),
        compiler_params=pltpu.CompilerParams(
            dimension_semantics=("parallel", "arbitrary"),
            vmem_limit_bytes=32 * 1024 * 1024,
        ),
        cost_estimate=cost,
    )(xb, w1s, b1s, w2s, b2s)
    return out


class KeypointHeadPallas:
    """Pallas port of KeypointHead (forward pass only), num_fcs=2."""

    def __init__(self, num_classes, num_points, num_fc_pre,
                 num_fcs=2, out_channels_fc=1024, use_sigmoid_cls=False,
                 tile_k=512, key=jax.random.PRNGKey(0)):
        assert num_fcs == 2, "this kernel implements the default num_fcs=2 path"
        self.num_classes = num_classes
        self.num_points = num_points
        self.cls_out_channels = (num_classes - 1) if use_sigmoid_cls else num_classes
        self.out_c = num_points * num_classes   # fc_cls width (matches torch)
        self.out_r = num_points * 2             # fc_reg width
        self.H = out_channels_fc
        self.K = num_fc_pre

        # K-tile: multiple of 128, capped at tile_k; pad K up to a multiple.
        tk = min(tile_k, _round_up(num_fc_pre, 128))
        self.tk = _round_up(tk, 128)
        self.K_pad = _round_up(num_fc_pre, self.tk)
        self.OUT_PAD = _round_up(max(self.out_c, self.out_r), 128)

        keys = jax.random.split(key, 4)
        w1c, b1c = _linear_init(keys[0], num_fc_pre, self.H)
        wc, bc = _linear_init(keys[1], self.H, self.out_c)
        w1r, b1r = _linear_init(keys[2], num_fc_pre, self.H)
        wr, br = _linear_init(keys[3], self.H, self.out_r)
        self.params_f32 = dict(w1c=w1c, b1c=b1c, wc=wc, bc=bc,
                               w1r=w1r, b1r=b1r, wr=wr, br=br)

        def pad_k(w):
            return jnp.pad(w, ((0, self.K_pad - num_fc_pre), (0, 0)))

        # Stacked first layer: (2, K_pad, H) bf16; branch 0 = cls, 1 = reg.
        self.w1s = jnp.stack([pad_k(w1c), pad_k(w1r)]).astype(jnp.bfloat16)
        self.b1s = jnp.stack([b1c, b1r]).astype(jnp.float32)        # (2, 1, H)

        # Stacked, lane-padded second layer: (2, H, OUT_PAD) bf16.
        w2s = jnp.zeros((2, self.H, self.OUT_PAD), jnp.float32)
        w2s = w2s.at[0, :, :self.out_c].set(wc)
        w2s = w2s.at[1, :, :self.out_r].set(wr)
        self.w2s = w2s.astype(jnp.bfloat16)
        b2s = jnp.zeros((2, 1, self.OUT_PAD), jnp.float32)
        b2s = b2s.at[0, 0, :self.out_c].set(bc[0])
        b2s = b2s.at[1, 0, :self.out_r].set(br[0])
        self.b2s = b2s

    def forward(self, x):
        # NCHW -> (B, C*H*W), same as torch x.view(x.size(0), -1)
        b = x.shape[0]
        x2d = x.reshape(b, -1)
        out = _fused_forward(x2d, self.w1s, self.b1s, self.w2s, self.b2s,
                             tk=self.tk)
        cls_pred = out[0, :, :self.out_c]
        reg_pred = out[1, :, :self.out_r]
        return [cls_pred], [reg_pred]


def _reference_forward(head, x):
    """Pure-JAX reference using the same bf16 weight rounding as the kernel."""
    x2d = x.reshape(x.shape[0], -1).astype(jnp.bfloat16)
    p = head.params_f32

    def branch(w1, b1, w2, b2):
        h = jnp.dot(x2d, w1.astype(jnp.bfloat16),
                    preferred_element_type=jnp.float32) + b1
        h = jnp.maximum(h, 0.0)
        o = jnp.dot(h.astype(jnp.bfloat16), w2.astype(jnp.bfloat16),
                    preferred_element_type=jnp.float32) + b2
        return o

    cls_pred = branch(p["w1c"], p["b1c"], p["wc"], p["bc"])
    reg_pred = branch(p["w1r"], p["b1r"], p["wr"], p["br"])
    return cls_pred, reg_pred


if __name__ == "__main__":
    # Small, module-consistent shapes: batch=2, channels=4, spatial=16x16
    # -> flattened feature dim num_fc_pre = 4*16*16 = 1024 (2 K-tiles of 512).
    key = jax.random.PRNGKey(0)
    kx, kp = jax.random.split(key)
    B, C, H, W = 2, 4, 16, 16
    x = jax.random.normal(kx, (B, C, H, W), dtype=jnp.float32)

    num_classes = 4
    num_points = 8
    head = KeypointHeadPallas(
        num_classes=num_classes,
        num_points=num_points,
        num_fc_pre=C * H * W,
        num_fcs=2,
        out_channels_fc=256,
        key=kp,
    )

    cls_preds, reg_preds = head.forward(x)
    cls_pred = jax.block_until_ready(cls_preds[0])
    reg_pred = jax.block_until_ready(reg_preds[0])

    assert cls_pred.shape == (B, num_points * num_classes)
    assert reg_pred.shape == (B, num_points * 2)

    ref_cls, ref_reg = _reference_forward(head, x)
    assert jnp.allclose(cls_pred, ref_cls, atol=2e-2, rtol=2e-2), \
        float(jnp.max(jnp.abs(cls_pred - ref_cls)))
    assert jnp.allclose(reg_pred, ref_reg, atol=2e-2, rtol=2e-2), \
        float(jnp.max(jnp.abs(reg_pred - ref_reg)))

    print("KERNEL_OK")
</pallas_src>

<mosaic_0001>
module attributes {stable_mosaic.version = 11 : i64} {
  func.func @_fused_head_kernel(%arg0: i32, %arg1: i32, %arg2: memref<2x512xbf16, #tpu.memory_space<vmem>>, %arg3: memref<1x512x256xbf16, #tpu.memory_space<vmem>>, %arg4: memref<1x1x256xf32, #tpu.memory_space<vmem>>, %arg5: memref<1x256x128xbf16, #tpu.memory_space<vmem>>, %arg6: memref<1x1x128xf32, #tpu.memory_space<vmem>>, %arg7: memref<1x2x128xf32, #tpu.memory_space<vmem>>, %arg8: memref<2x256xf32, #tpu.memory_space<vmem>>) attributes {dimension_semantics = [#tpu.dimension_semantics<parallel>, #tpu.dimension_semantics<arbitrary>], iteration_bounds = array<i64: 2, 2>, scalar_prefetch = 0 : i64, scratch_operands = 1 : i64, tpu.core_type = #tpu.core_type<tc>, window_params = [{transform_indices = @transform_0, window_bounds = array<i64: 2, 512>}, {transform_indices = @transform_1, window_bounds = array<i64: 1, 512, 256>}, {transform_indices = @transform_2, window_bounds = array<i64: 1, 1, 256>}, {transform_indices = @transform_3, window_bounds = array<i64: 1, 256, 128>}, {transform_indices = @transform_4, window_bounds = array<i64: 1, 1, 128>}, {transform_indices = @transform_5, window_bounds = array<i64: 1, 2, 128>}]} {
    %c0_i32 = arith.constant 0 : i32
    %0 = arith.cmpi eq, %arg1, %c0_i32 : i32
    %1 = arith.extui %0 : i1 to i32
    %c0_i32_0 = arith.constant 0 : i32
    %2 = arith.cmpi ne, %1, %c0_i32_0 : i32
    scf.if %2 {
      %cst_10 = arith.constant 0.000000e+00 : f32
      %13 = vector.broadcast %cst_10 : f32 to vector<2x256xf32>
      %c0_11 = arith.constant 0 : index
      %c0_12 = arith.constant 0 : index
      %14 = vector.load %arg8[%c0_11, %c0_12] : memref<2x256xf32, #tpu.memory_space<vmem>>, vector<2x256xf32>
      tpu.vector_store %arg8[%c0_11, %c0_12], %13 {strides = array<i32>} : memref<2x256xf32, #tpu.memory_space<vmem>>, vector<2x256xf32>,
    } else {
    }
    %c0 = arith.constant 0 : index
    %c0_1 = arith.constant 0 : index
    %3 = vector.load %arg8[%c0, %c0_1] : memref<2x256xf32, #tpu.memory_space<vmem>>, vector<2x256xf32>
    %c0_2 = arith.constant 0 : index
    %c0_3 = arith.constant 0 : index
    %4 = vector.load %arg2[%c0_2, %c0_3] : memref<2x512xbf16, #tpu.memory_space<vmem>>, vector<2x512xbf16>
    %c0_4 = arith.constant 0 : index
    %c0_5 = arith.constant 0 : index
    %c0_6 = arith.constant 0 : index
    %5 = vector.load %arg3[%c0_4, %c0_5, %c0_6] : memref<1x512x256xbf16, #tpu.memory_space<vmem>>, vector<1x512x256xbf16>
    %6 = vector.shape_cast %5 : vector<1x512x256xbf16> to vector<512x256xbf16>
    %cst = arith.constant dense<0.000000e+00> : vector<2x256xf32>
    %7 = tpu.matmul %4, %6, %cst {dimension_numbers = #tpu.dot_dimension_numbers<[1], [0], [0], [1], [0, 0, 1, 1], [], []>} : vector<2x512xbf16>, vector<512x256xbf16>, vector<2x256xf32> -> vector<2x256xf32>
    %8 = arith.addf %3, %7 : vector<2x256xf32>
    %c0_7 = arith.constant 0 : index
    %c0_8 = arith.constant 0 : index
    %9 = vector.load %arg8[%c0_7, %c0_8] : memref<2x256xf32, #tpu.memory_space<vmem>>, vector<2x256xf32>
    tpu.vector_store %arg8[%c0_7, %c0_8], %8 {strides = array<i32>} : memref<2x256xf32, #tpu.memory_space<vmem>>, vector<2x256xf32>,
    %c1_i32 = arith.constant 1 : i32
    %10 = arith.cmpi eq, %arg1, %c1_i32 : i32
    %11 = arith.extui %10 : i1 to i32
    %c0_i32_9 = arith.constant 0 : i32
    %12 = arith.cmpi ne, %11, %c0_i32_9 : i32
    scf.if %12 {
      %c0_10 = arith.constant 0 : index
      %c0_11 = arith.constant 0 : index
      %13 = vector.load %arg8[%c0_10, %c0_11] : memref<2x256xf32, #tpu.memory_space<vmem>>, vector<2x256xf32>
      %c0_12 = arith.constant 0 : index
      %c0_13 = arith.constant 0 : index
      %c0_14 = arith.constant 0 : index
      %14 = vector.load %arg4[%c0_12, %c0_13, %c0_14] : memref<1x1x256xf32, #tpu.memory_space<vmem>>, vector<1x1x256xf32>
      %15 = vector.shape_cast %14 : vector<1x1x256xf32> to vector<1x256xf32>
      %16 = vector.broadcast %15 : vector<1x256xf32> to vector<2x256xf32>
      %17 = arith.addf %13, %16 : vector<2x256xf32>
      %cst_15 = arith.constant 0.000000e+00 : f32
      %18 = vector.broadcast %cst_15 : f32 to vector<2x256xf32>
      %19 = arith.maximumf %17, %18 : vector<2x256xf32>
      %20 = arith.truncf %19 : vector<2x256xf32> to vector<2x256xbf16>
      %c0_16 = arith.constant 0 : index
      %c0_17 = arith.constant 0 : index
      %c0_18 = arith.constant 0 : index
      %21 = vector.load %arg5[%c0_16, %c0_17, %c0_18] : memref<1x256x128xbf16, #tpu.memory_space<vmem>>, vector<1x256x128xbf16>
      %22 = vector.shape_cast %21 : vector<1x256x128xbf16> to vector<256x128xbf16>
      %cst_19 = arith.constant dense<0.000000e+00> : vector<2x128xf32>
      %23 = tpu.matmul %20, %22, %cst_19 {dimension_numbers = #tpu.dot_dimension_numbers<[1], [0], [0], [1], [0, 0, 1, 1], [], []>} : vector<2x256xbf16>, vector<256x128xbf16>, vector<2x128xf32> -> vector<2x128xf32>
      %c0_20 = arith.constant 0 : index
      %c0_21 = arith.constant 0 : index
      %c0_22 = arith.constant 0 : index
      %24 = vector.load %arg6[%c0_20, %c0_21, %c0_22] : memref<1x1x128xf32, #tpu.memory_space<vmem>>, vector<1x1x128xf32>
      %25 = vector.shape_cast %24 : vector<1x1x128xf32> to vector<1x128xf32>
      %26 = vector.broadcast %25 : vector<1x128xf32> to vector<2x128xf32>
      %27 = arith.addf %23, %26 : vector<2x128xf32>
      %c0_23 = arith.constant 0 : index
      %c0_24 = arith.constant 0 : index
      %c0_25 = arith.constant 0 : index
      %28 = vector.load %arg7[%c0_23, %c0_24, %c0_25] : memref<1x2x128xf32, #tpu.memory_space<vmem>>, vector<1x2x128xf32>
      %29 = vector.shape_cast %28 : vector<1x2x128xf32> to vector<2x128xf32>
      %30 = vector.shape_cast %27 : vector<2x128xf32> to vector<1x2x128xf32>
      tpu.vector_store %arg7[%c0_23, %c0_24, %c0_25], %30 {strides = array<i32>} : memref<1x2x128xf32, #tpu.memory_space<vmem>>, vector<1x2x128xf32>,
    } else {
    }
    return
  }
  func.func @transform_0(%arg0: i32, %arg1: i32) -> (i32, i32) {
    %c0_i32 = arith.constant 0 : i32
    %c0_i32_0 = arith.constant 0 : i32
    return %c0_i32, %arg1 : i32, i32
  }
  func.func @transform_1(%arg0: i32, %arg1: i32) -> (i32, i32, i32) {
    %c0_i32 = arith.constant 0 : i32
    %c0_i32_0 = arith.constant 0 : i32
    return %arg0, %arg1, %c0_i32 : i32, i32, i32
  }
  func.func @transform_2(%arg0: i32, %arg1: i32) -> (i32, i32, i32) {
    %c0_i32 = arith.constant 0 : i32
    %c0_i32_0 = arith.constant 0 : i32
    %c0_i32_1 = arith.constant 0 : i32
    return %arg0, %c0_i32, %c0_i32_0 : i32, i32, i32
  }
  func.func @transform_3(%arg0: i32, %arg1: i32) -> (i32, i32, i32) {
    %c0_i32 = arith.constant 0 : i32
    %c0_i32_0 = arith.constant 0 : i32
    %c0_i32_1 = arith.constant 0 : i32
    return %arg0, %c0_i32, %c0_i32_0 : i32, i32, i32
  }
  func.func @transform_4(%arg0: i32, %arg1: i32) -> (i32, i32, i32) {
    %c0_i32 = arith.constant 0 : i32
    %c0_i32_0 = arith.constant 0 : i32
    %c0_i32_1 = arith.constant 0 : i32
    return %arg0, %c0_i32, %c0_i32_0 : i32, i32, i32
  }
  func.func @transform_5(%arg0: i32, %arg1: i32) -> (i32, i32, i32) {
    %c0_i32 = arith.constant 0 : i32
    %c0_i32_0 = arith.constant 0 : i32
    %c0_i32_1 = arith.constant 0 : i32
    return %arg0, %c0_i32, %c0_i32_0 : i32, i32, i32
  }
}

</mosaic_0001>

<llo_original>
// kernel: tpu_custom_call.1
$region0: #{tpu_custom_call.1}
  #allocation0 [shape = 'u32[]', space=smem, size = 0x4, offset = 0x4, fixed_abs, tag = 'smem constant byte address 0x4 - core index']
  #allocation1 [shape = 'u32[144,128]{1,0:T(1,128)}', space=vmem, size = 0x12000, scoped, tag = 'internal scratch']
  #allocation2 [shape = 'f32[2,256]{1,0:T(2,128)}', space=vmem, size = 0x800, scoped, tag = 'scratch operand']
  %s0 = inlined_call_operand.hbm [shape: bf16[2,1024], index: 0, kind: input, shape index: {}]
  %s1 = inlined_call_operand.hbm [shape: bf16[2,1024,256], index: 1, kind: input, shape index: {}]
  %s2 = inlined_call_operand.vmem [shape: f32[2,1,256], index: 2, kind: input, shape index: {}]
  %s3 = inlined_call_operand.hbm [shape: bf16[2,256,128], index: 3, kind: input, shape index: {}]
  %s4 = inlined_call_operand.vmem [shape: f32[2,1,128], index: 4, kind: input, shape index: {}]
  %s5 = inlined_call_operand.hbm [shape: f32[2,2,128], index: 5, kind: output, shape index: {}]
  %s6 = sld [smem:[#allocation0]]
  $region73: #{tpu_custom_call.1} parent=0
    _
  %s8 = ssub.s32 1, %s6
  %s9 = scalar_select 0, %s8, %s6
  $region1: #{tpu_custom_call.1} parent=0
    #allocation3 [shape = 'u8[4096]{0}', space=vmem, size = 0x1000, scoped, tag = 'input window, operand 0']
    #allocation4 [shape = 's32[2]{0}', space=sflag, size = 0x8, scoped, tag = 'scoped memory for tpu_custom_call.1']
    #allocation5 [shape = 's32[2]{0}', space=sflag, size = 0x8, scoped, tag = 'scoped memory for tpu_custom_call.1']
    #allocation6 [shape = 'u8[524288]{0}', space=vmem, size = 0x80000, scoped, tag = 'input window, operand 1']
    #allocation7 [shape = 's32[2]{0}', space=sflag, size = 0x8, scoped, tag = 'scoped memory for tpu_custom_call.1']
    #allocation8 [shape = 'u8[131072]{0}', space=vmem, size = 0x20000, scoped, tag = 'input window, operand 3']
    #allocation9 [shape = 'u8[2048]{0}', space=vmem, size = 0x800, scoped, tag = 'output window, operand 0']
    %10 = vsyncpa [#allocation4], 0
    %s11 = scalar_lea.sflag [#allocation4], 1
    %12 = vsyncpa %s11, 0
    %13 = vsyncpa [#allocation7], 0
    %s14 = scalar_lea.sflag [#allocation7], 1
    %15 = vsyncpa %s14, 0
    %16 = vsyncpa [#allocation5], 0
    %s17 = scalar_lea.sflag [#allocation5], 1
    %18 = vsyncpa %s17, 0
    loop: start=0, step=1, limit=6
    $region2: #{tpu_custom_call.1} parent=1 // loop_pre_header
      _
    $region3: #{tpu_custom_call.1} parent=1 // loop_header
      %s20 = sphi 0, %s24
      %p21 = scmp.ge.s32.totalorder %s20, 6
      %s27 = sphi 0, %s39
      %s28 = sphi 0, %s35
      %s29 = sphi 0, %s27
      %s30 = sphi 0, %s28
      %s31 = sphi 0, %s29
      %s32 = sphi 0, %s30
      %s42 = sphi 0, %s44
      %s45 = sphi 0, %s42
      %s46 = sphi 0, %s45
      %s62 = sphi 0, %s46
      %s70 = sphi 0, %s72
      %s73 = sphi 0, %s70
      %s74 = sphi 0, %s73
      %s90 = sphi 0, %s74
      %s96 = sphi 0, %s98
      %s99 = sphi 0, %s96
      %s100 = sphi 0, %s99
      %s116 = sphi 0, %s100
      %s122 = sphi 0, %s124
      %s125 = sphi 0, %s122
      %s126 = sphi 0, %s125
      %s142 = sphi 0, %s126
      %s148 = sphi 0, %s150
      %s151 = sphi 0, %s148
      %s152 = sphi 0, %s151
      %s168 = sphi 0, %s152
      %s174 = sphi 0, %s176
      %s177 = sphi 0, %s174
      %s178 = sphi 0, %s177
      %s194 = sphi 0, %s178
    $region4: #{tpu_custom_call.1} parent=1 // loop_header_branch
      %23 = sbr.rel (%p21) target = $region8
    $region5: #{tpu_custom_call.1} parent=1 // loop_body
      %s25 = ssub.s32 %s20, 1
      %s26 = ssub.s32 %s20, 2
      %s33 = sadd.s32 1, %s28
      %p34 = scmp.ge.s32.totalorder %s33, 2
      %s35 = scalar_select %p34, 0, %s33
      %s36 = sadd.s32 1, %s27
      %s37 = scalar_select %p34, %s36, %s27
      %p38 = scmp.ge.s32.totalorder %s37, 2
      %s39 = scalar_select %p38, 0, %s37
      %s40 = ssub.s32 %s28, %s35
      %p41 = scmp.eq.s32.totalorder %s40, 0
      %s43 = sadd.s32 %s42, 1
      %s44 = scalar_select %p41, %s42, %s43
      %p47 = pneg %p41
      %p48 = scmp.eq.s32.totalorder %s20, 3
      %p49 = por %p47, %p48
      %p50 = scmp.ne.s32.totalorder %s42, %s45
      %p51 = scmp.eq.s32.totalorder %s20, 0
      %p52 = por %p50, %p51
      %p53 = scmp.ne.s32.totalorder %s42, %s45
      %p54 = scmp.eq.s32.totalorder %s25, 3
      %p55 = por %p53, %p54
      %p56 = scmp.ne.s32.totalorder %s45, %s46
      %p57 = scmp.eq.s32.totalorder %s25, 0
      %p58 = por %p56, %p57
      %p59 = scmp.ne.s32.totalorder %s45, %s46
      %p60 = scmp.eq.s32.totalorder %s26, 3
      %p61 = por %p59, %p60
      %p63 = scmp.ne.s32.totalorder %s46, %s62
      %p64 = scmp.eq.s32.totalorder %s26, 0
      %p65 = por %p63, %p64
      %s66 = ssub.s32 %s27, %s39
      %s67 = ssub.s32 %s28, %s35
      %s68 = sor.u32 %s66, %s67
      %p69 = scmp.eq.s32.totalorder %s68, 0
      %s71 = sadd.s32 %s70, 1
      %s72 = scalar_select %p69, %s70, %s71
      %p75 = pneg %p69
      %p76 = scmp.eq.s32.totalorder %s20, 3
      %p77 = por %p75, %p76
      %p78 = scmp.ne.s32.totalorder %s70, %s73
      %p79 = scmp.eq.s32.totalorder %s20, 0
      %p80 = por %p78, %p79
      %p81 = scmp.ne.s32.totalorder %s70, %s73
      %p82 = scmp.eq.s32.totalorder %s25, 3
      %p83 = por %p81, %p82
      %p84 = scmp.ne.s32.totalorder %s73, %s74
      %p85 = scmp.eq.s32.totalorder %s25, 0
      %p86 = por %p84, %p85
      %p87 = scmp.ne.s32.totalorder %s73, %s74
      %p88 = scmp.eq.s32.totalorder %s26, 3
      %p89 = por %p87, %p88
      %p91 = scmp.ne.s32.totalorder %s74, %s90
      %p92 = scmp.eq.s32.totalorder %s26, 0
      %p93 = por %p91, %p92
      %s94 = ssub.s32 %s27, %s39
      %p95 = scmp.eq.s32.totalorder %s94, 0
      %s97 = sadd.s32 %s96, 1
      %s98 = scalar_select %p95, %s96, %s97
      %p101 = pneg %p95
      %p102 = scmp.eq.s32.totalorder %s20, 3
      %p103 = por %p101, %p102
      %p104 = scmp.ne.s32.totalorder %s96, %s99
      %p105 = scmp.eq.s32.totalorder %s20, 0
      %p106 = por %p104, %p105
      %p107 = scmp.ne.s32.totalorder %s96, %s99
      %p108 = scmp.eq.s32.totalorder %s25, 3
      %p109 = por %p107, %p108
      %p110 = scmp.ne.s32.totalorder %s99, %s100
      %p111 = scmp.eq.s32.totalorder %s25, 0
      %p112 = por %p110, %p111
      %p113 = scmp.ne.s32.totalorder %s99, %s100
      %p114 = scmp.eq.s32.totalorder %s26, 3
      %p115 = por %p113, %p114
      %p117 = scmp.ne.s32.totalorder %s100, %s116
      %p118 = scmp.eq.s32.totalorder %s26, 0
      %p119 = por %p117, %p118
      %s120 = ssub.s32 %s27, %s39
      %p121 = scmp.eq.s32.totalorder %s120, 0
      %s123 = sadd.s32 %s122, 1
      %s124 = scalar_select %p121, %s122, %s123
      %p127 = pneg %p121
      %p128 = scmp.eq.s32.totalorder %s20, 3
      %p129 = por %p127, %p128
      %p130 = scmp.ne.s32.totalorder %s122, %s125
      %p131 = scmp.eq.s32.totalorder %s20, 0
      %p132 = por %p130, %p131
      %p133 = scmp.ne.s32.totalorder %s122, %s125
      %p134 = scmp.eq.s32.totalorder %s25, 3
      %p135 = por %p133, %p134
      %p136 = scmp.ne.s32.totalorder %s125, %s126
      %p137 = scmp.eq.s32.totalorder %s25, 0
      %p138 = por %p136, %p137
      %p139 = scmp.ne.s32.totalorder %s125, %s126
      %p140 = scmp.eq.s32.totalorder %s26, 3
      %p141 = por %p139, %p140
      %p143 = scmp.ne.s32.totalorder %s126, %s142
      %p144 = scmp.eq.s32.totalorder %s26, 0
      %p145 = por %p143, %p144
      %s146 = ssub.s32 %s27, %s39
      %p147 = scmp.eq.s32.totalorder %s146, 0
      %s149 = sadd.s32 %s148, 1
      %s150 = scalar_select %p147, %s148, %s149
      %p153 = pneg %p147
      %p154 = scmp.eq.s32.totalorder %s20, 3
      %p155 = por %p153, %p154
      %p156 = scmp.ne.s32.totalorder %s148, %s151
      %p157 = scmp.eq.s32.totalorder %s20, 0
      %p158 = por %p156, %p157
      %p159 = scmp.ne.s32.totalorder %s148, %s151
      %p160 = scmp.eq.s32.totalorder %s25, 3
      %p161 = por %p159, %p160
      %p162 = scmp.ne.s32.totalorder %s151, %s152
      %p163 = scmp.eq.s32.totalorder %s25, 0
      %p164 = por %p162, %p163
      %p165 = scmp.ne.s32.totalorder %s151, %s152
      %p166 = scmp.eq.s32.totalorder %s26, 3
      %p167 = por %p165, %p166
      %p169 = scmp.ne.s32.totalorder %s152, %s168
      %p170 = scmp.eq.s32.totalorder %s26, 0
      %p171 = por %p169, %p170
      %s172 = ssub.s32 %s27, %s39
      %p173 = scmp.eq.s32.totalorder %s172, 0
      %s175 = sadd.s32 %s174, 1
      %s176 = scalar_select %p173, %s174, %s175
      %p179 = pneg %p173
      %p180 = scmp.eq.s32.totalorder %s20, 3
      %p181 = por %p179, %p180
      %p182 = scmp.ne.s32.totalorder %s174, %s177
      %p183 = scmp.eq.s32.totalorder %s20, 0
      %p184 = por %p182, %p183
      %p185 = scmp.ne.s32.totalorder %s174, %s177
      %p186 = scmp.eq.s32.totalorder %s25, 3
      %p187 = por %p185, %p186
      %p188 = scmp.ne.s32.totalorder %s177, %s178
      %p189 = scmp.eq.s32.totalorder %s25, 0
      %p190 = por %p188, %p189
      %p191 = scmp.ne.s32.totalorder %s177, %s178
      %p192 = scmp.eq.s32.totalorder %s26, 3
      %p193 = por %p191, %p192
      %p195 = scmp.ne.s32.totalorder %s178, %s194
      %p196 = scmp.eq.s32.totalorder %s26, 0
      %p197 = por %p195, %p196
      %p198 = scmp.le.s32.totalorder 1, %s20
      %p199 = scmp.lt.s32.totalorder %s20, 5
      %p200 = pnand %p198, %p199
      %p201 = pneg %p200
      // Predicated region
      $region9: #{tpu_custom_call.1} parent=5 // pred_check
        _
      $region10: #{tpu_custom_call.1} parent=5 // pred_check_branch
        %203 = sbr.rel (%p200) target = $region12
      $region11: #{tpu_custom_call.1} parent=5 // pred_region
        %s204 = ssub.s32 %s20, 1
      $region12: #{tpu_custom_call.1} parent=5 // pred_fallthru
        _
      %p205 = scmp.lt.s32.totalorder %s20, 4
      // Predicated region
      $region13: #{tpu_custom_call.1} parent=5 // pred_check
        %p206 = pneg %p205
      $region14: #{tpu_custom_call.1} parent=5 // pred_check_branch
        %208 = sbr.rel (%p206) target = $region16
      $region15: #{tpu_custom_call.1} parent=5 // pred_region
        // Predicated region
        $region17: #{tpu_custom_call.1} parent=15 // pred_check
          %p209 = pneg %p52
        $region18: #{tpu_custom_call.1} parent=15 // pred_check_branch
          %211 = sbr.rel (%p209) target = $region20
        $region19: #{tpu_custom_call.1} parent=15 // pred_region
          %s212 = sand.u32 %s42, 1
          %s213 = scalar_lea.sflag [#allocation4], %s212
          %s214 = sand.u32 %s42, 1
          %s215 = smul.addr %s214, 4
          %s216 = scalar_lea.vmem [#allocation3], %s215
          %s217 = smul.u32 4, %s28
          %s219 = ssub.s32 64, 64
          %220 = vsyncadd %s213, %s219
          %s221 = smul.addr %s217, 16
          %s222 = scalar_lea.hbm %s0, %s221
          %s224 = sshll.u32 %s216, 4
          %s225 = int_to_ptr.vmem [resolvable:$true] %s224
          %227 = dma.hbm_to_vmem [thread:$0]  %s222, 64, %s225, %s213
        $region20: #{tpu_custom_call.1} parent=15 // pred_fallthru
          _
        // Predicated region
        $region21: #{tpu_custom_call.1} parent=15 // pred_check
          %p228 = pneg %p80
        $region22: #{tpu_custom_call.1} parent=15 // pred_check_branch
          %230 = sbr.rel (%p228) target = $region24
        $region23: #{tpu_custom_call.1} parent=15 // pred_region
          %s231 = sand.u32 %s20, 1
          %s232 = scalar_lea.sflag [#allocation7], %s231
          %s233 = sand.u32 %s70, 1
          %s234 = smul.addr %s233, 512
          %s235 = scalar_lea.vmem [#allocation6], %s234
          %s236 = smul.u32 64, %s28
          %s238 = ssub.s32 8192, 8192
          %239 = vsyncadd %s232, %s238
          %s240 = smul.addr %s236, 2
          %s241 = smul.addr %s27, 256
          %s242 = sadd.s32 %s240, %s241
          %s243 = smul.addr %s242, 64
          %s244 = scalar_lea.hbm %s1, %s243
          %s245 = sshll.u32 %s235, 4
          %s246 = int_to_ptr.vmem [resolvable:$true] %s245
          %251 = dma.hbm_to_vmem [thread:$0]  %s244, 8192, %s246, %s232, 128, 128, 8
        $region24: #{tpu_custom_call.1} parent=15 // pred_fallthru
          _
        // Predicated region
        $region25: #{tpu_custom_call.1} parent=15 // pred_check
          %p252 = pneg %p106
        $region26: #{tpu_custom_call.1} parent=15 // pred_check_branch
          %254 = sbr.rel (%p252) target = $region28
        $region27: #{tpu_custom_call.1} parent=15 // pred_region
          %p255 = scmp.lt.s32.totalorder %s27, 1
          %s256 = scalar_select %p255, %s27, 1
          %s257 = smul.addr %s256, 2
          %s258 = scalar_lea.vmem %s2, %s257
        $region28: #{tpu_custom_call.1} parent=15 // pred_fallthru
          _
        // Predicated region
        $region29: #{tpu_custom_call.1} parent=15 // pred_check
          %p259 = pneg %p132
        $region30: #{tpu_custom_call.1} parent=15 // pred_check_branch
          %261 = sbr.rel (%p259) target = $region32
        $region31: #{tpu_custom_call.1} parent=15 // pred_region
          %s262 = sand.u32 %s20, 1
          %s263 = scalar_lea.sflag [#allocation7], %s262
          %s264 = sand.u32 %s122, 1
          %s265 = smul.addr %s264, 128
          %s266 = scalar_lea.vmem [#allocation8], %s265
          %s268 = ssub.s32 2048, 2048
          %269 = vsyncadd %s263, %s268
          %s270 = smul.addr %s27, 32
          %s271 = smul.addr %s270, 64
          %s272 = scalar_lea.hbm %s3, %s271
          %s273 = sshll.u32 %s266, 4
          %s274 = int_to_ptr.vmem [resolvable:$true] %s273
          %279 = dma.hbm_to_vmem [thread:$0]  %s272, 2048, %s274, %s263, 64, 64, 4
        $region32: #{tpu_custom_call.1} parent=15 // pred_fallthru
          _
        // Predicated region
        $region33: #{tpu_custom_call.1} parent=15 // pred_check
          %p280 = pneg %p158
        $region34: #{tpu_custom_call.1} parent=15 // pred_check_branch
          %282 = sbr.rel (%p280) target = $region36
        $region35: #{tpu_custom_call.1} parent=15 // pred_region
          %p283 = scmp.lt.s32.totalorder %s27, 1
          %s284 = scalar_select %p283, %s27, 1
          %s285 = scalar_lea.vmem %s4, %s284
        $region36: #{tpu_custom_call.1} parent=15 // pred_fallthru
          _
      $region16: #{tpu_custom_call.1} parent=5 // pred_fallthru
        _
      %p286 = scmp.le.s32.totalorder 1, %s20
      %p287 = scmp.lt.s32.totalorder %s20, 5
      %p288 = pnand %p286, %p287
      %p289 = pneg %p288
      // Predicated region
      $region37: #{tpu_custom_call.1} parent=5 // pred_check
        _
      $region38: #{tpu_custom_call.1} parent=5 // pred_check_branch
        %291 = sbr.rel (%p288) target = $region40
      $region39: #{tpu_custom_call.1} parent=5 // pred_region
        %s292 = ssub.s32 %s20, 1
        %s293 = sand.u32 %s45, 1
        %s294 = scalar_lea.sflag [#allocation4], %s293
        %s295 = sand.u32 %s45, 1
        %s296 = smul.addr %s295, 4
        %s297 = scalar_lea.vmem [#allocation3], %s296
        // Predicated region
        $region41: #{tpu_custom_call.1} parent=39 // pred_check
          %p298 = pneg %p58
        $region42: #{tpu_custom_call.1} parent=39 // pred_check_branch
          %300 = sbr.rel (%p298) target = $region44
        $region43: #{tpu_custom_call.1} parent=39 // pred_region
          %301 = dma.done %s294, 64
        $region44: #{tpu_custom_call.1} parent=39 // pred_fallthru
          _
        %s302 = sand.u32 %s25, 1
        %s303 = scalar_lea.sflag [#allocation7], %s302
        %s304 = sand.u32 %s73, 1
        %s305 = smul.addr %s304, 512
        %s306 = scalar_lea.vmem [#allocation6], %s305
        // Predicated region
        $region45: #{tpu_custom_call.1} parent=39 // pred_check
          %p307 = pneg %p86
        $region46: #{tpu_custom_call.1} parent=39 // pred_check_branch
          %309 = sbr.rel (%p307) target = $region48
        $region47: #{tpu_custom_call.1} parent=39 // pred_region
          %310 = dma.done %s303, 8192
        $region48: #{tpu_custom_call.1} parent=39 // pred_fallthru
          _
        %s311 = sand.u32 %s25, 1
        %s312 = scalar_lea.sflag [#allocation7], %s311
        %s313 = sand.u32 %s125, 1
        %s314 = smul.addr %s313, 128
        %s315 = scalar_lea.vmem [#allocation8], %s314
        // Predicated region
        $region49: #{tpu_custom_call.1} parent=39 // pred_check
          %p316 = pneg %p138
        $region50: #{tpu_custom_call.1} parent=39 // pred_check_branch
          %318 = sbr.rel (%p316) target = $region52
        $region51: #{tpu_custom_call.1} parent=39 // pred_region
          %319 = dma.done %s312, 2048
        $region52: #{tpu_custom_call.1} parent=39 // pred_fallthru
          _
        %s320 = sand.u32 %s45, 1
        %s321 = scalar_lea.sflag [#allocation4], %s320
        %s322 = sand.u32 %s45, 1
        %s323 = smul.addr %s322, 4
        %s324 = scalar_lea.vmem [#allocation3], %s323
        %p325 = pneg %p58
        %p326 = pneg %p55
        %s327 = sand.u32 %s25, 1
        %s328 = scalar_lea.sflag [#allocation7], %s327
        %s329 = sand.u32 %s73, 1
        %s330 = smul.addr %s329, 512
        %s331 = scalar_lea.vmem [#allocation6], %s330
        %p332 = pneg %p86
        %p333 = pneg %p83
        %p334 = scmp.lt.s32.totalorder %s29, 1
        %s335 = scalar_select %p334, %s29, 1
        %s336 = smul.addr %s335, 2
        %s337 = scalar_lea.vmem %s2, %s336
        %p338 = pneg %p112
        %p339 = pneg %p109
        %s340 = sand.u32 %s25, 1
        %s341 = scalar_lea.sflag [#allocation7], %s340
        %s342 = sand.u32 %s125, 1
        %s343 = smul.addr %s342, 128
        %s344 = scalar_lea.vmem [#allocation8], %s343
        %p345 = pneg %p138
        %p346 = pneg %p135
        %p347 = scmp.lt.s32.totalorder %s29, 1
        %s348 = scalar_select %p347, %s29, 1
        %s349 = scalar_lea.vmem %s4, %s348
        %p350 = pneg %p164
        %p351 = pneg %p161
        %p352 = pneg %p190
        %p353 = pneg %p187
        %s354 = sand.u32 %s177, 1
        %s355 = scalar_lea.sflag [#allocation5], %s354
        %s356 = sand.u32 %s177, 1
        %s357 = smul.addr %s356, 2
        %s358 = scalar_lea.vmem [#allocation9], %s357
        %s359 = smul.u32 4, %s30
        %s360 = smul.u32 64, %s30
        %p361 = scmp.lt.s32.totalorder %s29, 1
        %s362 = scalar_select %p361, %s29, 1
        %s363 = smul.addr %s362, 2
        %s364 = scalar_lea.vmem %s2, %s363
        %p365 = scmp.lt.s32.totalorder %s29, 1
        %s366 = scalar_select %p365, %s29, 1
        %s367 = scalar_lea.vmem %s4, %s366
        %p369 = scmp.eq.s32.totalorder %s30, 0
        // Predicated region
        $region53: #{tpu_custom_call.1} parent=39 // pred_check
          %p370 = pneg %p369
        $region54: #{tpu_custom_call.1} parent=39 // pred_check_branch
          %372 = sbr.rel (%p370) target = $region56
        $region55: #{tpu_custom_call.1} parent=39 // pred_region
          %373 = vst [vmem:[#allocation2] sm:$0xf] 0.0
        $region56: #{tpu_custom_call.1} parent=39 // pred_fallthru
          _
        %v374 = vld [vmem:[#allocation2] sm:$0xf]
        %v375 = vld [vmem:[%s297] sm:$0xf]
        %v376 = vld [vmem:[%s306] sm:$0xff]
        %v377 = vld [vmem:[%s306 + $0x8] sm:$0xff]
        %v378 = vld [vmem:[%s306 + $0x10] sm:$0xff]
        %v379 = vld [vmem:[%s306 + $0x18] sm:$0xff]
        %v380 = vld [vmem:[%s306 + $0x20] sm:$0xff]
        %v381 = vld [vmem:[%s306 + $0x28] sm:$0xff]
        %v382 = vld [vmem:[%s306 + $0x30] sm:$0xff]
        %v383 = vld [vmem:[%s306 + $0x38] sm:$0xff]
        %v384 = vld [vmem:[%s306 + $0x40] sm:$0xff]
        %v385 = vld [vmem:[%s306 + $0x48] sm:$0xff]
        %v386 = vld [vmem:[%s306 + $0x50] sm:$0xff]
        %v387 = vld [vmem:[%s306 + $0x58] sm:$0xff]
        %v388 = vld [vmem:[%s306 + $0x60] sm:$0xff]
        %v389 = vld [vmem:[%s306 + $0x68] sm:$0xff]
        %v390 = vld [vmem:[%s306 + $0x70] sm:$0xff]
        %v391 = vld [vmem:[%s306 + $0x78] sm:$0xff]
        %v392 = vld [vmem:[%s306 + $0x80] sm:$0xff]
        %v393 = vld [vmem:[%s306 + $0x88] sm:$0xff]
        %v394 = vld [vmem:[%s306 + $0x90] sm:$0xff]
        %v395 = vld [vmem:[%s306 + $0x98] sm:$0xff]
        %v396 = vld [vmem:[%s306 + $0xa0] sm:$0xff]
        %v397 = vld [vmem:[%s306 + $0xa8] sm:$0xff]
        %v398 = vld [vmem:[%s306 + $0xb0] sm:$0xff]
        %v399 = vld [vmem:[%s306 + $0xb8] sm:$0xff]
        %v400 = vld [vmem:[%s306 + $0xc0] sm:$0xff]
        %v401 = vld [vmem:[%s306 + $0xc8] sm:$0xff]
        %v402 = vld [vmem:[%s306 + $0xd0] sm:$0xff]
        %v403 = vld [vmem:[%s306 + $0xd8] sm:$0xff]
        %v404 = vld [vmem:[%s306 + $0xe0] sm:$0xff]
        %v405 = vld [vmem:[%s306 + $0xe8] sm:$0xff]
        %v406 = vld [vmem:[%s306 + $0xf0] sm:$0xff]
        %v407 = vld [vmem:[%s306 + $0xf8] sm:$0xff]
        %v408 = vld [vmem:[%s306 + $0x100] sm:$0xff]
        %v409 = vld [vmem:[%s306 + $0x108] sm:$0xff]
        %v410 = vld [vmem:[%s306 + $0x110] sm:$0xff]
        %v411 = vld [vmem:[%s306 + $0x118] sm:$0xff]
        %v412 = vld [vmem:[%s306 + $0x120] sm:$0xff]
        %v413 = vld [vmem:[%s306 + $0x128] sm:$0xff]
        %v414 = vld [vmem:[%s306 + $0x130] sm:$0xff]
        %v415 = vld [vmem:[%s306 + $0x138] sm:$0xff]
        %v416 = vld [vmem:[%s306 + $0x140] sm:$0xff]
        %v417 = vld [vmem:[%s306 + $0x148] sm:$0xff]
        %v418 = vld [vmem:[%s306 + $0x150] sm:$0xff]
        %v419 = vld [vmem:[%s306 + $0x158] sm:$0xff]
        %v420 = vld [vmem:[%s306 + $0x160] sm:$0xff]
        %v421 = vld [vmem:[%s306 + $0x168] sm:$0xff]
        %v422 = vld [vmem:[%s306 + $0x170] sm:$0xff]
        %v423 = vld [vmem:[%s306 + $0x178] sm:$0xff]
        %v424 = vld [vmem:[%s306 + $0x180] sm:$0xff]
        %v425 = vld [vmem:[%s306 + $0x188] sm:$0xff]
        %v426 = vld [vmem:[%s306 + $0x190] sm:$0xff]
        %v427 = vld [vmem:[%s306 + $0x198] sm:$0xff]
        %v428 = vld [vmem:[%s306 + $0x1a0] sm:$0xff]
        %v429 = vld [vmem:[%s306 + $0x1a8] sm:$0xff]
        %v430 = vld [vmem:[%s306 + $0x1b0] sm:$0xff]
        %v431 = vld [vmem:[%s306 + $0x1b8] sm:$0xff]
        %v432 = vld [vmem:[%s306 + $0x1c0] sm:$0xff]
        %v433 = vld [vmem:[%s306 + $0x1c8] sm:$0xff]
        %v434 = vld [vmem:[%s306 + $0x1d0] sm:$0xff]
        %v435 = vld [vmem:[%s306 + $0x1d8] sm:$0xff]
        %v436 = vld [vmem:[%s306 + $0x1e0] sm:$0xff]
        %v437 = vld [vmem:[%s306 + $0x1e8] sm:$0xff]
        %v438 = vld [vmem:[%s306 + $0x1f0] sm:$0xff]
        %v439 = vld [vmem:[%s306 + $0x1f8] sm:$0xff]
        %v442 = vunpack.c.l.s4 1966171168
        %v443 = vunpack.c.0.s8 %v442
        %v444 = vlaneseq
        %v445 = vshrl.u32 %v444, 7
        %v446 = vsub.s32 %v443, %v445
        %v447 = vrot.slane %v375, %v446
        %v448 = vcombine.high %v447, %v447
        %v450 = vunpack.c.l.s4 1966171168
        %v451 = vunpack.c.0.s8 %v450
        %v452 = vlaneseq
        %v453 = vshrl.u32 %v452, 7
        %v454 = vsub.s32 %v451, %v453
        %v455 = vrot.slane %v447, %v454
        %v457 = vunpack.c.l.s4 1966171168
        %v458 = vunpack.c.0.s8 %v457
        %v459 = vlaneseq
        %v460 = vshrl.u32 %v459, 7
        %v461 = vsub.s32 %v458, %v460
        %v462 = vrot.slane %v448, %v461
        %v463 = vcombine.high %v455, %v455
        %v464 = vcombine.high %v462, %v462
        %v533 = vunpack.c.l.b16 %v376
        %v534 = vunpack.c.h.b16 %v376
        %v535 = vunpack.c.l.b16 %v377
        %v536 = vunpack.c.h.b16 %v377
        %v537 = vunpack.c.l.b16 %v378
        %v538 = vunpack.c.h.b16 %v378
        %v539 = vunpack.c.l.b16 %v379
        %v540 = vunpack.c.h.b16 %v379
        %v541 = vunpack.c.l.b16 %v380
        %v542 = vunpack.c.h.b16 %v380
        %v543 = vunpack.c.l.b16 %v381
        %v544 = vunpack.c.h.b16 %v381
        %v545 = vunpack.c.l.b16 %v382
        %v546 = vunpack.c.h.b16 %v382
        %v547 = vunpack.c.l.b16 %v383
        %v548 = vunpack.c.h.b16 %v383
        %v549 = vunpack.c.l.b16 %v384
        %v550 = vunpack.c.h.b16 %v384
        %v551 = vunpack.c.l.b16 %v385
        %v552 = vunpack.c.h.b16 %v385
        %v553 = vunpack.c.l.b16 %v386
        %v554 = vunpack.c.h.b16 %v386
        %v555 = vunpack.c.l.b16 %v387
        %v556 = vunpack.c.h.b16 %v387
        %v557 = vunpack.c.l.b16 %v388
        %v558 = vunpack.c.h.b16 %v388
        %v559 = vunpack.c.l.b16 %v389
        %v560 = vunpack.c.h.b16 %v389
        %v561 = vunpack.c.l.b16 %v390
        %v562 = vunpack.c.h.b16 %v390
        %v563 = vunpack.c.l.b16 %v391
        %v564 = vunpack.c.h.b16 %v391
        %v565 = vunpack.c.l.b16 %v392
        %v566 = vunpack.c.h.b16 %v392
        %v567 = vunpack.c.l.b16 %v393
        %v568 = vunpack.c.h.b16 %v393
        %v569 = vunpack.c.l.b16 %v394
        %v570 = vunpack.c.h.b16 %v394
        %v571 = vunpack.c.l.b16 %v395
        %v572 = vunpack.c.h.b16 %v395
        %v573 = vunpack.c.l.b16 %v396
        %v574 = vunpack.c.h.b16 %v396
        %v575 = vunpack.c.l.b16 %v397
        %v576 = vunpack.c.h.b16 %v397
        %v577 = vunpack.c.l.b16 %v398
        %v578 = vunpack.c.h.b16 %v398
        %v579 = vunpack.c.l.b16 %v399
        %v580 = vunpack.c.h.b16 %v399
        %v581 = vunpack.c.l.b16 %v400
        %v582 = vunpack.c.h.b16 %v400
        %v583 = vunpack.c.l.b16 %v401
        %v584 = vunpack.c.h.b16 %v401
        %v585 = vunpack.c.l.b16 %v402
        %v586 = vunpack.c.h.b16 %v402
        %v587 = vunpack.c.l.b16 %v403
        %v588 = vunpack.c.h.b16 %v403
        %v589 = vunpack.c.l.b16 %v404
        %v590 = vunpack.c.h.b16 %v404
        %v591 = vunpack.c.l.b16 %v405
        %v592 = vunpack.c.h.b16 %v405
        %v593 = vunpack.c.l.b16 %v406
        %v594 = vunpack.c.h.b16 %v406
        %v595 = vunpack.c.l.b16 %v407
        %v596 = vunpack.c.h.b16 %v407
        %v597 = vunpack.c.l.b16 %v408
        %v598 = vunpack.c.h.b16 %v408
        %v599 = vunpack.c.l.b16 %v409
        %v600 = vunpack.c.h.b16 %v409
        %v601 = vunpack.c.l.b16 %v410
        %v602 = vunpack.c.h.b16 %v410
        %v603 = vunpack.c.l.b16 %v411
        %v604 = vunpack.c.h.b16 %v411
        %v605 = vunpack.c.l.b16 %v412
        %v606 = vunpack.c.h.b16 %v412
        %v607 = vunpack.c.l.b16 %v413
        %v608 = vunpack.c.h.b16 %v413
        %v609 = vunpack.c.l.b16 %v414
        %v610 = vunpack.c.h.b16 %v414
        %v611 = vunpack.c.l.b16 %v415
        %v612 = vunpack.c.h.b16 %v415
        %v613 = vunpack.c.l.b16 %v416
        %v614 = vunpack.c.h.b16 %v416
        %v615 = vunpack.c.l.b16 %v417
        %v616 = vunpack.c.h.b16 %v417
        %v617 = vunpack.c.l.b16 %v418
        %v618 = vunpack.c.h.b16 %v418
        %v619 = vunpack.c.l.b16 %v419
        %v620 = vunpack.c.h.b16 %v419
        %v621 = vunpack.c.l.b16 %v420
        %v622 = vunpack.c.h.b16 %v420
        %v623 = vunpack.c.l.b16 %v421
        %v624 = vunpack.c.h.b16 %v421
        %v625 = vunpack.c.l.b16 %v422
        %v626 = vunpack.c.h.b16 %v422
        %v627 = vunpack.c.l.b16 %v423
        %v628 = vunpack.c.h.b16 %v423
        %v629 = vunpack.c.l.b16 %v424
        %v630 = vunpack.c.h.b16 %v424
        %v631 = vunpack.c.l.b16 %v425
        %v632 = vunpack.c.h.b16 %v425
        %v633 = vunpack.c.l.b16 %v426
        %v634 = vunpack.c.h.b16 %v426
        %v635 = vunpack.c.l.b16 %v427
        %v636 = vunpack.c.h.b16 %v427
        %v637 = vunpack.c.l.b16 %v428
        %v638 = vunpack.c.h.b16 %v428
        %v639 = vunpack.c.l.b16 %v429
        %v640 = vunpack.c.h.b16 %v429
        %v641 = vunpack.c.l.b16 %v430
        %v642 = vunpack.c.h.b16 %v430
        %v643 = vunpack.c.l.b16 %v431
        %v644 = vunpack.c.h.b16 %v431
        %v645 = vunpack.c.l.b16 %v432
        %v646 = vunpack.c.h.b16 %v432
        %v647 = vunpack.c.l.b16 %v433
        %v648 = vunpack.c.h.b16 %v433
        %v649 = vunpack.c.l.b16 %v434
        %v650 = vunpack.c.h.b16 %v434
        %v651 = vunpack.c.l.b16 %v435
        %v652 = vunpack.c.h.b16 %v435
        %v653 = vunpack.c.l.b16 %v436
        %v654 = vunpack.c.h.b16 %v436
        %v655 = vunpack.c.l.b16 %v437
        %v656 = vunpack.c.h.b16 %v437
        %v657 = vunpack.c.l.b16 %v438
        %v658 = vunpack.c.h.b16 %v438
        %v659 = vunpack.c.l.b16 %v439
        %v660 = vunpack.c.h.b16 %v439
        %v661 = vpack.c.b16 %v535, %v533
        %v662 = vpack.c.b16 %v536, %v534
        %v663 = vpack.c.b16 %v539, %v537
        %v664 = vpack.c.b16 %v540, %v538
        %v665 = vpack.c.b16 %v543, %v541
        %v666 = vpack.c.b16 %v544, %v542
        %v667 = vpack.c.b16 %v547, %v545
        %v668 = vpack.c.b16 %v548, %v546
        %v669 = vpack.c.b16 %v551, %v549
        %v670 = vpack.c.b16 %v552, %v550
        %v671 = vpack.c.b16 %v555, %v553
        %v672 = vpack.c.b16 %v556, %v554
        %v673 = vpack.c.b16 %v559, %v557
        %v674 = vpack.c.b16 %v560, %v558
        %v675 = vpack.c.b16 %v563, %v561
        %v676 = vpack.c.b16 %v564, %v562
        %v677 = vpack.c.b16 %v567, %v565
        %v678 = vpack.c.b16 %v568, %v566
        %v679 = vpack.c.b16 %v571, %v569
        %v680 = vpack.c.b16 %v572, %v570
        %v681 = vpack.c.b16 %v575, %v573
        %v682 = vpack.c.b16 %v576, %v574
        %v683 = vpack.c.b16 %v579, %v577
        %v684 = vpack.c.b16 %v580, %v578
        %v685 = vpack.c.b16 %v583, %v581
        %v686 = vpack.c.b16 %v584, %v582
        %v687 = vpack.c.b16 %v587, %v585
        %v688 = vpack.c.b16 %v588, %v586
        %v689 = vpack.c.b16 %v591, %v589
        %v690 = vpack.c.b16 %v592, %v590
        %v691 = vpack.c.b16 %v595, %v593
        %v692 = vpack.c.b16 %v596, %v594
        %v693 = vpack.c.b16 %v599, %v597
        %v694 = vpack.c.b16 %v600, %v598
        %v695 = vpack.c.b16 %v603, %v601
        %v696 = vpack.c.b16 %v604, %v602
        %v697 = vpack.c.b16 %v607, %v605
        %v698 = vpack.c.b16 %v608, %v606
        %v699 = vpack.c.b16 %v611, %v609
        %v700 = vpack.c.b16 %v612, %v610
        %v701 = vpack.c.b16 %v615, %v613
        %v702 = vpack.c.b16 %v616, %v614
        %v703 = vpack.c.b16 %v619, %v617
        %v704 = vpack.c.b16 %v620, %v618
        %v705 = vpack.c.b16 %v623, %v621
        %v706 = vpack.c.b16 %v624, %v622
        %v707 = vpack.c.b16 %v627, %v625
        %v708 = vpack.c.b16 %v628, %v626
        %v709 = vpack.c.b16 %v631, %v629
        %v710 = vpack.c.b16 %v632, %v630
        %v711 = vpack.c.b16 %v635, %v633
        %v712 = vpack.c.b16 %v636, %v634
        %v713 = vpack.c.b16 %v639, %v637
        %v714 = vpack.c.b16 %v640, %v638
        %v715 = vpack.c.b16 %v643, %v641
        %v716 = vpack.c.b16 %v644, %v642
        %v717 = vpack.c.b16 %v647, %v645
        %v718 = vpack.c.b16 %v648, %v646
        %v719 = vpack.c.b16 %v651, %v649
        %v720 = vpack.c.b16 %v652, %v650
        %v721 = vpack.c.b16 %v655, %v653
        %v722 = vpack.c.b16 %v656, %v654
        %v723 = vpack.c.b16 %v659, %v657
        %v724 = vpack.c.b16 %v660, %v658
        %789 = vmatprep.subr.bf16.mxu0 %v662
        %790 = vmatpush1.bf16.msra.mxu0 %v661
        %791 = vmatprep.subr.bf16.mxu0 %v664
        %792 = vmatpush1.bf16.msra.mxu0 %v663
        %793 = vmatprep.subr.bf16.mxu0 %v666
        %794 = vmatpush1.bf16.msra.mxu0 %v665
        %795 = vmatprep.subr.bf16.mxu0 %v668
        %796 = vmatpush1.bf16.msra.mxu0 %v667
        %797 = vmatprep.subr.bf16.mxu0 %v670
        %798 = vmatpush1.bf16.msra.mxu0 %v669
        %799 = vmatprep.subr.bf16.mxu0 %v672
        %800 = vmatpush1.bf16.msra.mxu0 %v671
        %801 = vmatprep.subr.bf16.mxu0 %v674
        %802 = vmatpush1.bf16.msra.mxu0 %v673
        %803 = vmatprep.subr.bf16.mxu0 %v676
        %804 = vmatpush1.bf16.msra.mxu0 %v675
        %805 = vmatprep.subr.bf16.mxu0 %v678
        %806 = vmatpush1.bf16.msra.mxu0 %v677
        %807 = vmatprep.subr.bf16.mxu0 %v680
        %808 = vmatpush1.bf16.msra.mxu0 %v679
        %809 = vmatprep.subr.bf16.mxu0 %v682
        %810 = vmatpush1.bf16.msra.mxu0 %v681
        %811 = vmatprep.subr.bf16.mxu0 %v684
        %812 = vmatpush1.bf16.msra.mxu0 %v683
        %813 = vmatprep.subr.bf16.mxu0 %v686
        %814 = vmatpush1.bf16.msra.mxu0 %v685
        %815 = vmatprep.subr.bf16.mxu0 %v688
        %816 = vmatpush1.bf16.msra.mxu0 %v687
        %817 = vmatprep.subr.bf16.mxu0 %v690
        %818 = vmatpush1.bf16.msra.mxu0 %v689
        %819 = vmatprep.subr.bf16.mxu0 %v692
        %820 = vmatpush1.bf16.msra.mxu0 %v691
        %821 = vmatprep.mubr.bf16.mxu0 %v462
        %822 = vmatmul.mubr.bf16.gmra.mrb[0].mxu0 %v455
        %v823 = vpop.f32.mrb[0].mxu0
        %v824 = vadd.f32 0.0, %v823
        %v825 = vpop.f32.mrb[0].mxu0
        %v826 = vadd.f32 0.0, %v825
        %v827 = vpop.f32.mrb[0].mxu0
        %v828 = vpop.f32.mrb[0].mxu0
        %829 = vdwg.mxu0
        %830 = vmatprep.subr.bf16.mxu0 %v694
        %831 = vmatpush1.bf16.msra.mxu0 %v693
        %832 = vmatprep.subr.bf16.mxu0 %v696
        %833 = vmatpush1.bf16.msra.mxu0 %v695
        %834 = vmatprep.subr.bf16.mxu0 %v698
        %835 = vmatpush1.bf16.msra.mxu0 %v697
        %836 = vmatprep.subr.bf16.mxu0 %v700
        %837 = vmatpush1.bf16.msra.mxu0 %v699
        %838 = vmatprep.subr.bf16.mxu0 %v702
        %839 = vmatpush1.bf16.msra.mxu0 %v701
        %840 = vmatprep.subr.bf16.mxu0 %v704
        %841 = vmatpush1.bf16.msra.mxu0 %v703
        %842 = vmatprep.subr.bf16.mxu0 %v706
        %843 = vmatpush1.bf16.msra.mxu0 %v705
        %844 = vmatprep.subr.bf16.mxu0 %v708
        %845 = vmatpush1.bf16.msra.mxu0 %v707
        %846 = vmatprep.subr.bf16.mxu0 %v710
        %847 = vmatpush1.bf16.msra.mxu0 %v709
        %848 = vmatprep.subr.bf16.mxu0 %v712
        %849 = vmatpush1.bf16.msra.mxu0 %v711
        %850 = vmatprep.subr.bf16.mxu0 %v714
        %851 = vmatpush1.bf16.msra.mxu0 %v713
        %852 = vmatprep.subr.bf16.mxu0 %v716
        %853 = vmatpush1.bf16.msra.mxu0 %v715
        %854 = vmatprep.subr.bf16.mxu0 %v718
        %855 = vmatpush1.bf16.msra.mxu0 %v717
        %856 = vmatprep.subr.bf16.mxu0 %v720
        %857 = vmatpush1.bf16.msra.mxu0 %v719
        %858 = vmatprep.subr.bf16.mxu0 %v722
        %859 = vmatpush1.bf16.msra.mxu0 %v721
        %860 = vmatprep.subr.bf16.mxu0 %v724
        %861 = vmatpush1.bf16.msra.mxu0 %v723
        %862 = vmatprep.mubr.bf16.mxu0 %v464
        %863 = vmatmul.mubr.bf16.gmra.mrb[0].mxu0 %v463
        %v864 = vpop.f32.mrb[0].mxu0
        %v865 = vadd.f32 %v824, %v864
        %v866 = vpop.f32.mrb[0].mxu0
        %v867 = vadd.f32 %v826, %v866
        %v868 = vpop.f32.mrb[0].mxu0
        %v869 = vpop.f32.mrb[0].mxu0
        %870 = vdwg.mxu0
        %v873 = vcombine.low %v865, %v867
        %v875 = vunpack.c.l.s4 1983009808
        %v876 = vunpack.c.0.s8 %v875
        %v877 = vlaneseq
        %v878 = vshrl.u32 %v877, 7
        %v879 = vsub.s32 %v876, %v878
        %v880 = vrot.slane %v873, %v879
        %v882 = vadd.f32 %v374, %v880
        %883 = vst [vmem:[#allocation2] sm:$0xf] %v882
        %p884 = scmp.eq.s32.totalorder %s30, 1
        // Predicated region
        $region57: #{tpu_custom_call.1} parent=39 // pred_check
          %p885 = pneg %p884
        $region58: #{tpu_custom_call.1} parent=39 // pred_check_branch
          %887 = sbr.rel (%p885) target = $region60
        $region59: #{tpu_custom_call.1} parent=39 // pred_region
          %v888 = vld [vmem:[#allocation2] sm:$0xf]
          %v889 = vld [vmem:[%s364] sm:$0x3]
          %v891 = vlaneseq
          %v892 = vshrl.u32 %v891, 7
          %v893 = vsub.s32 0, %v892
          %v894 = vrot.slane %v889, %v893
          %v895 = vlaneseq
          %v896 = vshrl.u32 %v895, 7
          %v897 = vsub.s32 1, %v896
          %v898 = vrot.slane %v889, %v897
          %v899 = vcombine.low %v894, %v898
          %v901 = vunpack.c.l.s4 1983009808
          %v902 = vunpack.c.0.s8 %v901
          %v903 = vlaneseq
          %v904 = vshrl.u32 %v903, 7
          %v905 = vsub.s32 %v902, %v904
          %v906 = vrot.slane %v899, %v905
          %v908 = vadd.f32 %v888, %v906
          %v909 = vmax.f32 %v908, 0.0
          %v912 = vunpack.c.l.s4 1983009808
          %v913 = vunpack.c.0.s8 %v912
          %v914 = vlaneseq
          %v915 = vshrl.u32 %v914, 7
          %v916 = vsub.s32 %v913, %v915
          %v917 = vrot.slane %v909, %v916
          %v918 = vcombine.high %v917, %v917
          %v921 = vpack.c.bf16 %v917, %v917
          %v922 = vpack.c.bf16 %v918, %v918
          %v923 = vld [vmem:[%s315] sm:$0xf]
          %v924 = vld [vmem:[%s315 + $0x4] sm:$0xf]
          %v925 = vld [vmem:[%s315 + $0x8] sm:$0xf]
          %v926 = vld [vmem:[%s315 + $0xc] sm:$0xf]
          %v927 = vld [vmem:[%s315 + $0x10] sm:$0xf]
          %v928 = vld [vmem:[%s315 + $0x14] sm:$0xf]
          %v929 = vld [vmem:[%s315 + $0x18] sm:$0xf]
          %v930 = vld [vmem:[%s315 + $0x1c] sm:$0xf]
          %v931 = vld [vmem:[%s315 + $0x20] sm:$0xf]
          %v932 = vld [vmem:[%s315 + $0x24] sm:$0xf]
          %v933 = vld [vmem:[%s315 + $0x28] sm:$0xf]
          %v934 = vld [vmem:[%s315 + $0x2c] sm:$0xf]
          %v935 = vld [vmem:[%s315 + $0x30] sm:$0xf]
          %v936 = vld [vmem:[%s315 + $0x34] sm:$0xf]
          %v937 = vld [vmem:[%s315 + $0x38] sm:$0xf]
          %v938 = vld [vmem:[%s315 + $0x3c] sm:$0xf]
          %v939 = vld [vmem:[%s315 + $0x40] sm:$0xf]
          %v940 = vld [vmem:[%s315 + $0x44] sm:$0xf]
          %v941 = vld [vmem:[%s315 + $0x48] sm:$0xf]
          %v942 = vld [vmem:[%s315 + $0x4c] sm:$0xf]
          %v943 = vld [vmem:[%s315 + $0x50] sm:$0xf]
          %v944 = vld [vmem:[%s315 + $0x54] sm:$0xf]
          %v945 = vld [vmem:[%s315 + $0x58] sm:$0xf]
          %v946 = vld [vmem:[%s315 + $0x5c] sm:$0xf]
          %v947 = vld [vmem:[%s315 + $0x60] sm:$0xf]
          %v948 = vld [vmem:[%s315 + $0x64] sm:$0xf]
          %v949 = vld [vmem:[%s315 + $0x68] sm:$0xf]
          %v950 = vld [vmem:[%s315 + $0x6c] sm:$0xf]
          %v951 = vld [vmem:[%s315 + $0x70] sm:$0xf]
          %v952 = vld [vmem:[%s315 + $0x74] sm:$0xf]
          %v953 = vld [vmem:[%s315 + $0x78] sm:$0xf]
          %v954 = vld [vmem:[%s315 + $0x7c] sm:$0xf]
          %v955 = vld [vmem:[%s367] sm:$0x1]
          %v957 = vlaneseq
          %v958 = vshrl.u32 %v957, 7
          %v959 = vsub.s32 0, %v958
          %v960 = vrot.slane %v955, %v959
          %v994 = vunpack.c.l.b16 %v923
          %v995 = vunpack.c.l.b16 %v924
          %v996 = vunpack.c.l.b16 %v925
          %v997 = vunpack.c.l.b16 %v926
          %v998 = vunpack.c.l.b16 %v927
          %v999 = vunpack.c.l.b16 %v928
          %v1000 = vunpack.c.l.b16 %v929
          %v1001 = vunpack.c.l.b16 %v930
          %v1002 = vunpack.c.l.b16 %v931
          %v1003 = vunpack.c.l.b16 %v932
          %v1004 = vunpack.c.l.b16 %v933
          %v1005 = vunpack.c.l.b16 %v934
          %v1006 = vunpack.c.l.b16 %v935
          %v1007 = vunpack.c.l.b16 %v936
          %v1008 = vunpack.c.l.b16 %v937
          %v1009 = vunpack.c.l.b16 %v938
          %v1010 = vunpack.c.l.b16 %v939
          %v1011 = vunpack.c.l.b16 %v940
          %v1012 = vunpack.c.l.b16 %v941
          %v1013 = vunpack.c.l.b16 %v942
          %v1014 = vunpack.c.l.b16 %v943
          %v1015 = vunpack.c.l.b16 %v944
          %v1016 = vunpack.c.l.b16 %v945
          %v1017 = vunpack.c.l.b16 %v946
          %v1018 = vunpack.c.l.b16 %v947
          %v1019 = vunpack.c.l.b16 %v948
          %v1020 = vunpack.c.l.b16 %v949
          %v1021 = vunpack.c.l.b16 %v950
          %v1022 = vunpack.c.l.b16 %v951
          %v1023 = vunpack.c.l.b16 %v952
          %v1024 = vunpack.c.l.b16 %v953
          %v1025 = vunpack.c.l.b16 %v954
          %v1026 = vpack.c.b16 %v995, %v994
          %v1027 = vpack.c.b16 %v997, %v996
          %v1028 = vpack.c.b16 %v999, %v998
          %v1029 = vpack.c.b16 %v1001, %v1000
          %v1030 = vpack.c.b16 %v1003, %v1002
          %v1031 = vpack.c.b16 %v1005, %v1004
          %v1032 = vpack.c.b16 %v1007, %v1006
          %v1033 = vpack.c.b16 %v1009, %v1008
          %v1034 = vpack.c.b16 %v1011, %v1010
          %v1035 = vpack.c.b16 %v1013, %v1012
          %v1036 = vpack.c.b16 %v1015, %v1014
          %v1037 = vpack.c.b16 %v1017, %v1016
          %v1038 = vpack.c.b16 %v1019, %v1018
          %v1039 = vpack.c.b16 %v1021, %v1020
          %v1040 = vpack.c.b16 %v1023, %v1022
          %v1041 = vpack.c.b16 %v1025, %v1024
          %1058 = vmatprep.subr.bf16.mxu0 0
          %1059 = vmatpush1.bf16.msra.mxu0 %v1026
          %1060 = vmatprep.subr.bf16.mxu0 0
          %1061 = vmatpush1.bf16.msra.mxu0 %v1027
          %1062 = vmatprep.subr.bf16.mxu0 0
          %1063 = vmatpush1.bf16.msra.mxu0 %v1028
          %1064 = vmatprep.subr.bf16.mxu0 0
          %1065 = vmatpush1.bf16.msra.mxu0 %v1029
          %1066 = vmatprep.subr.bf16.mxu0 0
          %1067 = vmatpush1.bf16.msra.mxu0 %v1030
          %1068 = vmatprep.subr.bf16.mxu0 0
          %1069 = vmatpush1.bf16.msra.mxu0 %v1031
          %1070 = vmatprep.subr.bf16.mxu0 0
          %1071 = vmatpush1.bf16.msra.mxu0 %v1032
          %1072 = vmatprep.subr.bf16.mxu0 0
          %1073 = vmatpush1.bf16.msra.mxu0 %v1033
          %1074 = vmatprep.subr.bf16.mxu0 0
          %1075 = vmatpush1.bf16.msra.mxu0 %v1034
          %1076 = vmatprep.subr.bf16.mxu0 0
          %1077 = vmatpush1.bf16.msra.mxu0 %v1035
          %1078 = vmatprep.subr.bf16.mxu0 0
          %1079 = vmatpush1.bf16.msra.mxu0 %v1036
          %1080 = vmatprep.subr.bf16.mxu0 0
          %1081 = vmatpush1.bf16.msra.mxu0 %v1037
          %1082 = vmatprep.subr.bf16.mxu0 0
          %1083 = vmatpush1.bf16.msra.mxu0 %v1038
          %1084 = vmatprep.subr.bf16.mxu0 0
          %1085 = vmatpush1.bf16.msra.mxu0 %v1039
          %1086 = vmatprep.subr.bf16.mxu0 0
          %1087 = vmatpush1.bf16.msra.mxu0 %v1040
          %1088 = vmatprep.subr.bf16.mxu0 0
          %1089 = vmatpush1.bf16.msra.mxu0 %v1041
          %1090 = vmatprep.mubr.bf16.mxu0 %v922
          %1091 = vmatmul.mubr.bf16.gmra.mrb[0].mxu0 %v921
          %v1092 = vpop.f32.mrb[0].mxu0
          %v1093 = vadd.f32 %v960, %v1092
          %v1094 = vpop.f32.mrb[0].mxu0
          %v1095 = vpop.f32.mrb[0].mxu0
          %v1096 = vpop.f32.mrb[0].mxu0
          %1097 = vdwg.mxu0
          %1098 = vst [vmem:[%s358] sm:$0x3] %v1093
        $region60: #{tpu_custom_call.1} parent=39 // pred_fallthru
          _
        %s1099 = sand.u32 %s177, 1
        %s1100 = scalar_lea.sflag [#allocation5], %s1099
        %s1101 = sand.u32 %s177, 1
        %s1102 = smul.addr %s1101, 2
        %s1103 = scalar_lea.vmem [#allocation9], %s1102
        // Predicated region
        $region61: #{tpu_custom_call.1} parent=39 // pred_check
          %p1104 = pneg %p187
        $region62: #{tpu_custom_call.1} parent=39 // pred_check_branch
          %1106 = sbr.rel (%p1104) target = $region64
        $region63: #{tpu_custom_call.1} parent=39 // pred_region
          %s1108 = ssub.s32 32, 32
          %1109 = vsyncadd %s1100, %s1108
          %s1110 = smul.addr %s29, 32
          %s1111 = scalar_lea.hbm %s5, %s1110
          %s1113 = sshll.u32 %s1103, 4
          %s1114 = int_to_ptr.vmem [resolvable:$true] %s1113
          %1116 = dma.vmem_to_hbm [thread:$0]  %s1114, 32, %s1111, %s1100
        $region64: #{tpu_custom_call.1} parent=39 // pred_fallthru
          _
      $region40: #{tpu_custom_call.1} parent=5 // pred_fallthru
        _
      %p1117 = scmp.le.s32.totalorder 2, %s20
      // Predicated region
      $region65: #{tpu_custom_call.1} parent=5 // pred_check
        %p1118 = pneg %p1117
      $region66: #{tpu_custom_call.1} parent=5 // pred_check_branch
        %1120 = sbr.rel (%p1118) target = $region68
      $region67: #{tpu_custom_call.1} parent=5 // pred_region
        %s1121 = ssub.s32 %s20, 2
        // Predicated region
        $region69: #{tpu_custom_call.1} parent=67 // pred_check
          %p1122 = pneg %p193
        $region70: #{tpu_custom_call.1} parent=67 // pred_check_branch
          %1124 = sbr.rel (%p1122) target = $region72
        $region71: #{tpu_custom_call.1} parent=67 // pred_region
          %s1125 = sand.u32 %s178, 1
          %s1126 = scalar_lea.sflag [#allocation5], %s1125
          %s1127 = sand.u32 %s178, 1
          %s1128 = smul.addr %s1127, 2
          %s1129 = scalar_lea.vmem [#allocation9], %s1128
          %1130 = dma.done %s1126, 32
        $region72: #{tpu_custom_call.1} parent=67 // pred_fallthru
          _
      $region68: #{tpu_custom_call.1} parent=5 // pred_fallthru
        _
    $region6: #{tpu_custom_call.1} parent=1 // loop_footer
      %s24 = sadd.s32 1, %s20
    $region7: #{tpu_custom_call.1} parent=1 // loop_footer_branch
      %19 = sbr.rel target = $region3
    $region8: #{tpu_custom_call.1} parent=1 // loop_exit
      _
    %1131 = vsyncpa [#allocation4], 1
    %s1132 = scalar_lea.sflag [#allocation4], 1
    %1133 = vsyncpa %s1132, 1
    %1134 = vsyncpa [#allocation7], 1
    %s1135 = scalar_lea.sflag [#allocation7], 1
    %1136 = vsyncpa %s1135, 1
    %1137 = vsyncpa [#allocation5], 1
    %s1138 = scalar_lea.sflag [#allocation5], 1
    %1139 = vsyncpa %s1138, 1

</llo_original>
